<compile_context>
chip_gen: v7x
topology: tpu7x:2x2x1
jax: 0.10.0
libtpu: 0.0.40
codegen_flags: <defaults>
</compile_context>

<pallas_src>
import math
import jax
import jax.numpy as jnp
from jax.experimental import pallas as pl
from jax.experimental.pallas import tpu as pltpu


def _round_up(x, m):
    return ((x + m - 1) // m) * m


def fmlp_encoder_kernel(x_ref, w1_ref, b1_ref, w2_ref, b2_ref, w3_ref, b3_ref, o_ref):
    # One (tb, 128) tile of x per grid step; all three matmuls (MXU) + tanh (EUP)
    # fused.  f32 accumulation via preferred_element_type; activations are cast back
    # to the weight dtype between layers so bf16 weights keep the native bf16 MXU path.
    x = x_ref[...]
    h1 = jnp.tanh(
        jnp.dot(x, w1_ref[...], preferred_element_type=jnp.float32)
        + b1_ref[...].astype(jnp.float32)
    )
    h2 = jnp.tanh(
        jnp.dot(h1.astype(w2_ref.dtype), w2_ref[...], preferred_element_type=jnp.float32)
        + b2_ref[...].astype(jnp.float32)
    )
    h3 = jnp.tanh(
        jnp.dot(h2.astype(w3_ref.dtype), w3_ref[...], preferred_element_type=jnp.float32)
        + b3_ref[...].astype(jnp.float32)
    )
    o_ref[...] = h3.astype(o_ref.dtype)  # lane-dense (tb, 128) store; padded cols are 0


def fmlp_encoder(x, params, *, max_block_b=8192, min_steps=4):
    """x: (B, 122). params: w1,b1,w2,b2,w3,b3 with w: (in, out), b: (1, out).

    All weights must share one dtype (f32 or bf16); x is cast to it explicitly.
    Returns (B, nz) in the weight dtype.
    """
    w1, b1 = params["w1"], params["b1"]
    w2, b2 = params["w2"], params["b2"]
    w3, b3 = params["w3"], params["b3"]

    wdtype = w1.dtype
    assert all(a.dtype == wdtype for a in (b1, w2, b2, w3, b3)), (
        "all weights/biases must share one dtype"
    )
    if x.dtype != wdtype:
        # Explicit cast: avoids silent f32 promotion of the dots (keeps the
        # single-pass bf16 MXU path when weights are bf16).
        x = x.astype(wdtype)

    B, in_f = x.shape
    nz = w3.shape[1]

    # --- host-side prep: lane-pad K (122 -> 128) and N (nz -> 128) ---------------
    in_pad = _round_up(in_f, 128)
    out_pad = _round_up(nz, 128)
    if in_pad != in_f:
        x = jnp.pad(x, ((0, 0), (0, in_pad - in_f)))
        w1 = jnp.pad(w1, ((0, in_pad - in_f), (0, 0)))       # zero K-rows: math unchanged
    if out_pad != nz:
        w3 = jnp.pad(w3, ((0, 0), (0, out_pad - nz)))         # zero N-cols -> tanh(0)=0
        b3 = jnp.pad(b3, ((0, 0), (0, out_pad - nz)))

    # --- batch tiling: B-derived, even multi-step grid, bounded padding ----------
    n_steps = max(min_steps, pl.cdiv(B, max_block_b))
    if n_steps % 2:
        n_steps += 1                                          # even split across 2 TCs (v7x)
    tb = _round_up(max(16, pl.cdiv(B, n_steps)), 16)          # multiple of 16 sublanes
    pb = tb * n_steps
    if pb != B:
        x = jnp.pad(x, ((0, pb - B), (0, 0)))                 # garbage rows sliced off below
    grid = (n_steps,)

    batch_map = lambda i: (i, 0)    # x / out tiles march down the batch axis
    const_map = lambda i: (0, 0)    # weights & biases stay VMEM-resident

    # --- cost estimate & VMEM budget ---------------------------------------------
    h1_f, h2_f = w1.shape[1], w2.shape[1]
    itemsize = jnp.dtype(wdtype).itemsize
    flops = 2 * pb * (in_pad * h1_f + h1_f * h2_f + h2_f * out_pad)
    transcendentals = pb * (h1_f + h2_f + out_pad)
    bytes_accessed = (
        x.nbytes + w1.nbytes + b1.nbytes + w2.nbytes + b2.nbytes
        + w3.nbytes + b3.nbytes + pb * out_pad * itemsize
    )
    weight_bytes = sum(a.nbytes for a in (w1, b1, w2, b2, w3, b3))
    # 2 buffers for each streamed array (x, out) + resident weights + headroom.
    vmem_need = 2 * (tb * in_pad + tb * out_pad) * itemsize + weight_bytes + (4 << 20)
    vmem_limit = int(min(max(vmem_need, 16 << 20), 56 << 20))

    out = pl.pallas_call(
        fmlp_encoder_kernel,
        out_shape=jax.ShapeDtypeStruct((pb, out_pad), wdtype),
        grid=grid,
        in_specs=[
            pl.BlockSpec((tb, in_pad), batch_map),
            pl.BlockSpec(w1.shape, const_map),
            pl.BlockSpec(b1.shape, const_map),
            pl.BlockSpec(w2.shape, const_map),
            pl.BlockSpec(b2.shape, const_map),
            pl.BlockSpec(w3.shape, const_map),
            pl.BlockSpec(b3.shape, const_map),
        ],
        out_specs=pl.BlockSpec((tb, out_pad), batch_map),
        compiler_params=pltpu.CompilerParams(
            dimension_semantics=("parallel",),   # 2-TC batch sharding on v7x
            vmem_limit_bytes=vmem_limit,
        ),
        cost_estimate=pl.CostEstimate(
            flops=flops,
            transcendentals=transcendentals,
            bytes_accessed=bytes_accessed,
        ),
    )(x, w1, b1, w2, b2, w3, b3)

    return out[:B, :nz]


def init_linear(key, in_f, out_f):
    # Mimic torch.nn.Linear default init: U(-1/sqrt(in_f), 1/sqrt(in_f)).
    kw, kb = jax.random.split(key)
    bound = 1.0 / math.sqrt(in_f)
    w = jax.random.uniform(kw, (in_f, out_f), jnp.float32, -bound, bound)
    b = jax.random.uniform(kb, (1, out_f), jnp.float32, -bound, bound)
    return w, b


def reference(x, params):
    h = jnp.tanh(x @ params["w1"] + params["b1"])
    h = jnp.tanh(h @ params["w2"] + params["b2"])
    h = jnp.tanh(h @ params["w3"] + params["b3"])
    return h


if __name__ == "__main__":
    key = jax.random.PRNGKey(0)
    k_x, k1, k2, k3 = jax.random.split(key, 4)

    B = 8          # batch
    IN = 122       # fixed by the module (nn.Linear(122, 64))
    H1, H2 = 64, 32
    NZ = 8         # nz

    x = jax.random.normal(k_x, (B, IN), jnp.float32)

    w1, b1 = init_linear(k1, IN, H1)
    w2, b2 = init_linear(k2, H1, H2)
    w3, b3 = init_linear(k3, H2, NZ)
    params = {"w1": w1, "b1": b1, "w2": w2, "b2": b2, "w3": w3, "b3": b3}

    ref = reference(x, params)

    # f32 path: tight check against the JAX reference.
    out = jax.block_until_ready(fmlp_encoder(x, params))
    assert out.shape == (B, NZ), out.shape
    assert jnp.allclose(out, ref, atol=1e-5, rtol=1e-5), "f32 mismatch vs. JAX reference"

    # bf16-everywhere production path (halves bytes on the binding x HBM stream and
    # keeps all dots on the single-pass bf16 MXU path; accumulation/tanh stay f32).
    params_bf16 = {k: v.astype(jnp.bfloat16) for k, v in params.items()}
    out_bf16 = jax.block_until_ready(
        fmlp_encoder(x.astype(jnp.bfloat16), params_bf16)
    )
    assert out_bf16.shape == (B, NZ), out_bf16.shape
    assert jnp.allclose(out_bf16.astype(jnp.float32), ref, atol=5e-2, rtol=5e-2), (
        "bf16 mismatch vs. JAX reference"
    )

    print("KERNEL_OK")
</pallas_src>

<mosaic_0001>
module attributes {stable_mosaic.version = 11 : i64} {
  func.func @fmlp_encoder_kernel(%arg0: i32, %arg1: memref<16x128xf32, #tpu.memory_space<vmem>>, %arg2: memref<128x64xf32, #tpu.memory_space<vmem>>, %arg3: memref<1x64xf32, #tpu.memory_space<vmem>>, %arg4: memref<64x32xf32, #tpu.memory_space<vmem>>, %arg5: memref<1x32xf32, #tpu.memory_space<vmem>>, %arg6: memref<32x128xf32, #tpu.memory_space<vmem>>, %arg7: memref<1x128xf32, #tpu.memory_space<vmem>>, %arg8: memref<16x128xf32, #tpu.memory_space<vmem>>) attributes {dimension_semantics = [#tpu.dimension_semantics<parallel>], iteration_bounds = array<i64: 4>, scalar_prefetch = 0 : i64, scratch_operands = 0 : i64, tpu.core_type = #tpu.core_type<tc>, window_params = [{transform_indices = @transform_0, window_bounds = array<i64: 16, 128>}, {pipeline_mode = #tpu.pipeline_mode<synchronous>, transform_indices = @transform_1, window_bounds = array<i64: 128, 64>}, {pipeline_mode = #tpu.pipeline_mode<synchronous>, transform_indices = @transform_2, window_bounds = array<i64: 1, 64>}, {pipeline_mode = #tpu.pipeline_mode<synchronous>, transform_indices = @transform_3, window_bounds = array<i64: 64, 32>}, {pipeline_mode = #tpu.pipeline_mode<synchronous>, transform_indices = @transform_4, window_bounds = array<i64: 1, 32>}, {pipeline_mode = #tpu.pipeline_mode<synchronous>, transform_indices = @transform_5, window_bounds = array<i64: 32, 128>}, {pipeline_mode = #tpu.pipeline_mode<synchronous>, transform_indices = @transform_6, window_bounds = array<i64: 1, 128>}, {transform_indices = @transform_7, window_bounds = array<i64: 16, 128>}]} {
    %c0 = arith.constant 0 : index
    %c0_0 = arith.constant 0 : index
    %0 = vector.load %arg1[%c0, %c0_0] : memref<16x128xf32, #tpu.memory_space<vmem>>, vector<16x128xf32>
    %c0_1 = arith.constant 0 : index
    %c0_2 = arith.constant 0 : index
    %1 = vector.load %arg2[%c0_1, %c0_2] : memref<128x64xf32, #tpu.memory_space<vmem>>, vector<128x64xf32>
    %cst = arith.constant dense<0.000000e+00> : vector<16x64xf32>
    %2 = tpu.matmul %0, %1, %cst {dimension_numbers = #tpu.dot_dimension_numbers<[1], [0], [0], [1], [0, 0, 1, 1], [], []>} : vector<16x128xf32>, vector<128x64xf32>, vector<16x64xf32> -> vector<16x64xf32>
    %c0_3 = arith.constant 0 : index
    %c0_4 = arith.constant 0 : index
    %3 = vector.load %arg3[%c0_3, %c0_4] : memref<1x64xf32, #tpu.memory_space<vmem>>, vector<1x64xf32>
    %4 = vector.broadcast %3 : vector<1x64xf32> to vector<16x64xf32>
    %5 = arith.addf %2, %4 : vector<16x64xf32>
    %6 = math.tanh %5 : vector<16x64xf32>
    %c0_5 = arith.constant 0 : index
    %c0_6 = arith.constant 0 : index
    %7 = vector.load %arg4[%c0_5, %c0_6] : memref<64x32xf32, #tpu.memory_space<vmem>>, vector<64x32xf32>
    %cst_7 = arith.constant dense<0.000000e+00> : vector<16x32xf32>
    %8 = tpu.matmul %6, %7, %cst_7 {dimension_numbers = #tpu.dot_dimension_numbers<[1], [0], [0], [1], [0, 0, 1, 1], [], []>} : vector<16x64xf32>, vector<64x32xf32>, vector<16x32xf32> -> vector<16x32xf32>
    %c0_8 = arith.constant 0 : index
    %c0_9 = arith.constant 0 : index
    %9 = vector.load %arg5[%c0_8, %c0_9] : memref<1x32xf32, #tpu.memory_space<vmem>>, vector<1x32xf32>
    %10 = vector.broadcast %9 : vector<1x32xf32> to vector<16x32xf32>
    %11 = arith.addf %8, %10 : vector<16x32xf32>
    %12 = math.tanh %11 : vector<16x32xf32>
    %c0_10 = arith.constant 0 : index
    %c0_11 = arith.constant 0 : index
    %13 = vector.load %arg6[%c0_10, %c0_11] : memref<32x128xf32, #tpu.memory_space<vmem>>, vector<32x128xf32>
    %cst_12 = arith.constant dense<0.000000e+00> : vector<16x128xf32>
    %14 = tpu.matmul %12, %13, %cst_12 {dimension_numbers = #tpu.dot_dimension_numbers<[1], [0], [0], [1], [0, 0, 1, 1], [], []>} : vector<16x32xf32>, vector<32x128xf32>, vector<16x128xf32> -> vector<16x128xf32>
    %c0_13 = arith.constant 0 : index
    %c0_14 = arith.constant 0 : index
    %15 = vector.load %arg7[%c0_13, %c0_14] : memref<1x128xf32, #tpu.memory_space<vmem>>, vector<1x128xf32>
    %16 = vector.broadcast %15 : vector<1x128xf32> to vector<16x128xf32>
    %17 = arith.addf %14, %16 : vector<16x128xf32>
    %18 = math.tanh %17 : vector<16x128xf32>
    %c0_15 = arith.constant 0 : index
    %c0_16 = arith.constant 0 : index
    %19 = vector.load %arg8[%c0_15, %c0_16] : memref<16x128xf32, #tpu.memory_space<vmem>>, vector<16x128xf32>
    tpu.vector_store %arg8[%c0_15, %c0_16], %18 {strides = array<i32>} : memref<16x128xf32, #tpu.memory_space<vmem>>, vector<16x128xf32>,
    return
  }
  func.func @transform_0(%arg0: i32) -> (i32, i32) {
    %c0_i32 = arith.constant 0 : i32
    %c0_i32_0 = arith.constant 0 : i32
    return %arg0, %c0_i32 : i32, i32
  }
  func.func @transform_1(%arg0: i32) -> (i32, i32) {
    %c0_i32 = arith.constant 0 : i32
    %c0_i32_0 = arith.constant 0 : i32
    %c0_i32_1 = arith.constant 0 : i32
    return %c0_i32, %c0_i32_0 : i32, i32
  }
  func.func @transform_2(%arg0: i32) -> (i32, i32) {
    %c0_i32 = arith.constant 0 : i32
    %c0_i32_0 = arith.constant 0 : i32
    %c0_i32_1 = arith.constant 0 : i32
    return %c0_i32, %c0_i32_0 : i32, i32
  }
  func.func @transform_3(%arg0: i32) -> (i32, i32) {
    %c0_i32 = arith.constant 0 : i32
    %c0_i32_0 = arith.constant 0 : i32
    %c0_i32_1 = arith.constant 0 : i32
    return %c0_i32, %c0_i32_0 : i32, i32
  }
  func.func @transform_4(%arg0: i32) -> (i32, i32) {
    %c0_i32 = arith.constant 0 : i32
    %c0_i32_0 = arith.constant 0 : i32
    %c0_i32_1 = arith.constant 0 : i32
    return %c0_i32, %c0_i32_0 : i32, i32
  }
  func.func @transform_5(%arg0: i32) -> (i32, i32) {
    %c0_i32 = arith.constant 0 : i32
    %c0_i32_0 = arith.constant 0 : i32
    %c0_i32_1 = arith.constant 0 : i32
    return %c0_i32, %c0_i32_0 : i32, i32
  }
  func.func @transform_6(%arg0: i32) -> (i32, i32) {
    %c0_i32 = arith.constant 0 : i32
    %c0_i32_0 = arith.constant 0 : i32
    %c0_i32_1 = arith.constant 0 : i32
    return %c0_i32, %c0_i32_0 : i32, i32
  }
  func.func @transform_7(%arg0: i32) -> (i32, i32) {
    %c0_i32 = arith.constant 0 : i32
    %c0_i32_0 = arith.constant 0 : i32
    return %arg0, %c0_i32 : i32, i32
  }
}

</mosaic_0001>

<llo_original>
// kernel: tpu_custom_call.1
$region0: #{tpu_custom_call.1}
  #allocation0 [shape = 'u32[]', space=smem, size = 0x4, offset = 0x4, fixed_abs, tag = 'smem constant byte address 0x4 - core index']
  #allocation1 [shape = 'u32[144,128]{1,0:T(1,128)}', space=vmem, size = 0x12000, scoped, tag = 'internal scratch']
  %s0 = inlined_call_operand.vmem [shape: f32[64,128], index: 0, kind: input, shape index: {}]
  %s1 = inlined_call_operand.vmem [shape: f32[128,64], index: 1, kind: input, shape index: {}]
  %s2 = inlined_call_operand.vmem [shape: f32[1,64], index: 2, kind: input, shape index: {}]
  %s3 = inlined_call_operand.vmem [shape: f32[64,32], index: 3, kind: input, shape index: {}]
  %s4 = inlined_call_operand.vmem [shape: f32[1,32], index: 4, kind: input, shape index: {}]
  %s5 = inlined_call_operand.vmem [shape: f32[32,128], index: 5, kind: input, shape index: {}]
  %s6 = inlined_call_operand.vmem [shape: f32[1,128], index: 6, kind: input, shape index: {}]
  %s7 = inlined_call_operand.hbm [shape: f32[64,128], index: 7, kind: output, shape index: {}]
  %s8 = sld [smem:[#allocation0]]
  $region61: #{tpu_custom_call.1} parent=0
    _
  %s10 = ssub.s32 1, %s8
  %s11 = scalar_select 0, %s10, %s8
  $region1: #{tpu_custom_call.1} parent=0
    #allocation2 [shape = 'u8[16384]{0}', space=vmem, size = 0x4000, scoped, tag = 'output window, operand 0']
    #allocation3 [shape = 's32[2]{0}', space=sflag, size = 0x8, scoped, tag = 'scoped memory for tpu_custom_call.1']
    %12 = vsyncpa [#allocation3], 0
    %s13 = scalar_lea.sflag [#allocation3], 1
    %14 = vsyncpa %s13, 0
    loop: start=0, step=1, limit=6
    $region2: #{tpu_custom_call.1} parent=1 // loop_pre_header
      _
    $region3: #{tpu_custom_call.1} parent=1 // loop_header
      %s16 = sphi 0, %s20
      %p17 = scmp.ge.s32.totalorder %s16, 6
      %s26 = sphi 0, %s28
      %s29 = sphi 0, %s26
      %s30 = sphi 0, %s29
      %s46 = sphi 0, %s30
      %s50 = sphi 0, %s50
      %s52 = sphi 0, %s50
      %s53 = sphi 0, %s52
      %s67 = sphi 0, %s53
      %s71 = sphi 0, %s71
      %s73 = sphi 0, %s71
      %s74 = sphi 0, %s73
      %s88 = sphi 0, %s74
      %s92 = sphi 0, %s92
      %s94 = sphi 0, %s92
      %s95 = sphi 0, %s94
      %s109 = sphi 0, %s95
      %s113 = sphi 0, %s113
      %s115 = sphi 0, %s113
      %s116 = sphi 0, %s115
      %s130 = sphi 0, %s116
      %s134 = sphi 0, %s134
      %s136 = sphi 0, %s134
      %s137 = sphi 0, %s136
      %s151 = sphi 0, %s137
      %s155 = sphi 0, %s155
      %s157 = sphi 0, %s155
      %s158 = sphi 0, %s157
      %s172 = sphi 0, %s158
      %s178 = sphi 0, %s180
      %s181 = sphi 0, %s178
      %s182 = sphi 0, %s181
      %s198 = sphi 0, %s182
    $region4: #{tpu_custom_call.1} parent=1 // loop_header_branch
      %19 = sbr.rel (%p17) target = $region8
    $region5: #{tpu_custom_call.1} parent=1 // loop_body
      %s21 = ssub.s32 %s16, 1
      %s22 = ssub.s32 %s16, 2
      %s23 = sadd.s32 %s16, 1
      %s24 = ssub.s32 %s16, %s23
      %p25 = scmp.eq.s32.totalorder %s24, 0
      %s27 = sadd.s32 %s26, 1
      %s28 = scalar_select %p25, %s26, %s27
      %p31 = pneg %p25
      %p32 = scmp.eq.s32.totalorder %s16, 3
      %p33 = por %p31, %p32
      %p34 = scmp.ne.s32.totalorder %s26, %s29
      %p35 = scmp.eq.s32.totalorder %s16, 0
      %p36 = por %p34, %p35
      %p37 = scmp.ne.s32.totalorder %s26, %s29
      %p38 = scmp.eq.s32.totalorder %s21, 3
      %p39 = por %p37, %p38
      %p40 = scmp.ne.s32.totalorder %s29, %s30
      %p41 = scmp.eq.s32.totalorder %s21, 0
      %p42 = por %p40, %p41
      %p43 = scmp.ne.s32.totalorder %s29, %s30
      %p44 = scmp.eq.s32.totalorder %s22, 3
      %p45 = por %p43, %p44
      %p47 = scmp.ne.s32.totalorder %s30, %s46
      %p48 = scmp.eq.s32.totalorder %s22, 0
      %p49 = por %p47, %p48
      %s51 = sadd.s32 %s50, 1
      %p54 = scmp.eq.s32.totalorder %s16, 3
      %p55 = scmp.ne.s32.totalorder %s50, %s52
      %p56 = scmp.eq.s32.totalorder %s16, 0
      %p57 = por %p55, %p56
      %p58 = scmp.ne.s32.totalorder %s50, %s52
      %p59 = scmp.eq.s32.totalorder %s21, 3
      %p60 = por %p58, %p59
      %p61 = scmp.ne.s32.totalorder %s52, %s53
      %p62 = scmp.eq.s32.totalorder %s21, 0
      %p63 = por %p61, %p62
      %p64 = scmp.ne.s32.totalorder %s52, %s53
      %p65 = scmp.eq.s32.totalorder %s22, 3
      %p66 = por %p64, %p65
      %p68 = scmp.ne.s32.totalorder %s53, %s67
      %p69 = scmp.eq.s32.totalorder %s22, 0
      %p70 = por %p68, %p69
      %s72 = sadd.s32 %s71, 1
      %p75 = scmp.eq.s32.totalorder %s16, 3
      %p76 = scmp.ne.s32.totalorder %s71, %s73
      %p77 = scmp.eq.s32.totalorder %s16, 0
      %p78 = por %p76, %p77
      %p79 = scmp.ne.s32.totalorder %s71, %s73
      %p80 = scmp.eq.s32.totalorder %s21, 3
      %p81 = por %p79, %p80
      %p82 = scmp.ne.s32.totalorder %s73, %s74
      %p83 = scmp.eq.s32.totalorder %s21, 0
      %p84 = por %p82, %p83
      %p85 = scmp.ne.s32.totalorder %s73, %s74
      %p86 = scmp.eq.s32.totalorder %s22, 3
      %p87 = por %p85, %p86
      %p89 = scmp.ne.s32.totalorder %s74, %s88
      %p90 = scmp.eq.s32.totalorder %s22, 0
      %p91 = por %p89, %p90
      %s93 = sadd.s32 %s92, 1
      %p96 = scmp.eq.s32.totalorder %s16, 3
      %p97 = scmp.ne.s32.totalorder %s92, %s94
      %p98 = scmp.eq.s32.totalorder %s16, 0
      %p99 = por %p97, %p98
      %p100 = scmp.ne.s32.totalorder %s92, %s94
      %p101 = scmp.eq.s32.totalorder %s21, 3
      %p102 = por %p100, %p101
      %p103 = scmp.ne.s32.totalorder %s94, %s95
      %p104 = scmp.eq.s32.totalorder %s21, 0
      %p105 = por %p103, %p104
      %p106 = scmp.ne.s32.totalorder %s94, %s95
      %p107 = scmp.eq.s32.totalorder %s22, 3
      %p108 = por %p106, %p107
      %p110 = scmp.ne.s32.totalorder %s95, %s109
      %p111 = scmp.eq.s32.totalorder %s22, 0
      %p112 = por %p110, %p111
      %s114 = sadd.s32 %s113, 1
      %p117 = scmp.eq.s32.totalorder %s16, 3
      %p118 = scmp.ne.s32.totalorder %s113, %s115
      %p119 = scmp.eq.s32.totalorder %s16, 0
      %p120 = por %p118, %p119
      %p121 = scmp.ne.s32.totalorder %s113, %s115
      %p122 = scmp.eq.s32.totalorder %s21, 3
      %p123 = por %p121, %p122
      %p124 = scmp.ne.s32.totalorder %s115, %s116
      %p125 = scmp.eq.s32.totalorder %s21, 0
      %p126 = por %p124, %p125
      %p127 = scmp.ne.s32.totalorder %s115, %s116
      %p128 = scmp.eq.s32.totalorder %s22, 3
      %p129 = por %p127, %p128
      %p131 = scmp.ne.s32.totalorder %s116, %s130
      %p132 = scmp.eq.s32.totalorder %s22, 0
      %p133 = por %p131, %p132
      %s135 = sadd.s32 %s134, 1
      %p138 = scmp.eq.s32.totalorder %s16, 3
      %p139 = scmp.ne.s32.totalorder %s134, %s136
      %p140 = scmp.eq.s32.totalorder %s16, 0
      %p141 = por %p139, %p140
      %p142 = scmp.ne.s32.totalorder %s134, %s136
      %p143 = scmp.eq.s32.totalorder %s21, 3
      %p144 = por %p142, %p143
      %p145 = scmp.ne.s32.totalorder %s136, %s137
      %p146 = scmp.eq.s32.totalorder %s21, 0
      %p147 = por %p145, %p146
      %p148 = scmp.ne.s32.totalorder %s136, %s137
      %p149 = scmp.eq.s32.totalorder %s22, 3
      %p150 = por %p148, %p149
      %p152 = scmp.ne.s32.totalorder %s137, %s151
      %p153 = scmp.eq.s32.totalorder %s22, 0
      %p154 = por %p152, %p153
      %s156 = sadd.s32 %s155, 1
      %p159 = scmp.eq.s32.totalorder %s16, 3
      %p160 = scmp.ne.s32.totalorder %s155, %s157
      %p161 = scmp.eq.s32.totalorder %s16, 0
      %p162 = por %p160, %p161
      %p163 = scmp.ne.s32.totalorder %s155, %s157
      %p164 = scmp.eq.s32.totalorder %s21, 3
      %p165 = por %p163, %p164
      %p166 = scmp.ne.s32.totalorder %s157, %s158
      %p167 = scmp.eq.s32.totalorder %s21, 0
      %p168 = por %p166, %p167
      %p169 = scmp.ne.s32.totalorder %s157, %s158
      %p170 = scmp.eq.s32.totalorder %s22, 3
      %p171 = por %p169, %p170
      %p173 = scmp.ne.s32.totalorder %s158, %s172
      %p174 = scmp.eq.s32.totalorder %s22, 0
      %p175 = por %p173, %p174
      %s176 = ssub.s32 %s16, %s23
      %p177 = scmp.eq.s32.totalorder %s176, 0
      %s179 = sadd.s32 %s178, 1
      %s180 = scalar_select %p177, %s178, %s179
      %p183 = pneg %p177
      %p184 = scmp.eq.s32.totalorder %s16, 3
      %p185 = por %p183, %p184
      %p186 = scmp.ne.s32.totalorder %s178, %s181
      %p187 = scmp.eq.s32.totalorder %s16, 0
      %p188 = por %p186, %p187
      %p189 = scmp.ne.s32.totalorder %s178, %s181
      %p190 = scmp.eq.s32.totalorder %s21, 3
      %p191 = por %p189, %p190
      %p192 = scmp.ne.s32.totalorder %s181, %s182
      %p193 = scmp.eq.s32.totalorder %s21, 0
      %p194 = por %p192, %p193
      %p195 = scmp.ne.s32.totalorder %s181, %s182
      %p196 = scmp.eq.s32.totalorder %s22, 3
      %p197 = por %p195, %p196
      %p199 = scmp.ne.s32.totalorder %s182, %s198
      %p200 = scmp.eq.s32.totalorder %s22, 0
      %p201 = por %p199, %p200
      %p202 = scmp.le.s32.totalorder 1, %s16
      %p203 = scmp.lt.s32.totalorder %s16, 5
      %p204 = pnand %p202, %p203
      %p205 = pneg %p204
      // Predicated region
      $region9: #{tpu_custom_call.1} parent=5 // pred_check
        _
      $region10: #{tpu_custom_call.1} parent=5 // pred_check_branch
        %207 = sbr.rel (%p204) target = $region12
      $region11: #{tpu_custom_call.1} parent=5 // pred_region
        %s208 = ssub.s32 %s16, 1
        // Predicated region
        $region13: #{tpu_custom_call.1} parent=11 // pred_check
          %p209 = pneg %p63
        $region14: #{tpu_custom_call.1} parent=11 // pred_check_branch
          %211 = sbr.rel (%p209) target = $region16
        $region15: #{tpu_custom_call.1} parent=11 // pred_region
          _
        $region16: #{tpu_custom_call.1} parent=11 // pred_fallthru
          _
        // Predicated region
        $region17: #{tpu_custom_call.1} parent=11 // pred_check
          %p212 = pneg %p84
        $region18: #{tpu_custom_call.1} parent=11 // pred_check_branch
          %214 = sbr.rel (%p212) target = $region20
        $region19: #{tpu_custom_call.1} parent=11 // pred_region
          _
        $region20: #{tpu_custom_call.1} parent=11 // pred_fallthru
          _
        // Predicated region
        $region21: #{tpu_custom_call.1} parent=11 // pred_check
          %p215 = pneg %p105
        $region22: #{tpu_custom_call.1} parent=11 // pred_check_branch
          %217 = sbr.rel (%p215) target = $region24
        $region23: #{tpu_custom_call.1} parent=11 // pred_region
          _
        $region24: #{tpu_custom_call.1} parent=11 // pred_fallthru
          _
        // Predicated region
        $region25: #{tpu_custom_call.1} parent=11 // pred_check
          %p218 = pneg %p126
        $region26: #{tpu_custom_call.1} parent=11 // pred_check_branch
          %220 = sbr.rel (%p218) target = $region28
        $region27: #{tpu_custom_call.1} parent=11 // pred_region
          _
        $region28: #{tpu_custom_call.1} parent=11 // pred_fallthru
          _
        // Predicated region
        $region29: #{tpu_custom_call.1} parent=11 // pred_check
          %p221 = pneg %p147
        $region30: #{tpu_custom_call.1} parent=11 // pred_check_branch
          %223 = sbr.rel (%p221) target = $region32
        $region31: #{tpu_custom_call.1} parent=11 // pred_region
          _
        $region32: #{tpu_custom_call.1} parent=11 // pred_fallthru
          _
        // Predicated region
        $region33: #{tpu_custom_call.1} parent=11 // pred_check
          %p224 = pneg %p168
        $region34: #{tpu_custom_call.1} parent=11 // pred_check_branch
          %226 = sbr.rel (%p224) target = $region36
        $region35: #{tpu_custom_call.1} parent=11 // pred_region
          _
        $region36: #{tpu_custom_call.1} parent=11 // pred_fallthru
          _
      $region12: #{tpu_custom_call.1} parent=5 // pred_fallthru
        _
      %p227 = scmp.lt.s32.totalorder %s16, 4
      // Predicated region
      $region37: #{tpu_custom_call.1} parent=5 // pred_check
        %p228 = pneg %p227
      $region38: #{tpu_custom_call.1} parent=5 // pred_check_branch
        %230 = sbr.rel (%p228) target = $region40
      $region39: #{tpu_custom_call.1} parent=5 // pred_region
        // Predicated region
        $region41: #{tpu_custom_call.1} parent=39 // pred_check
          %p231 = pneg %p36
        $region42: #{tpu_custom_call.1} parent=39 // pred_check_branch
          %233 = sbr.rel (%p231) target = $region44
        $region43: #{tpu_custom_call.1} parent=39 // pred_region
          %s234 = smul.u32 2, %s16
          %p235 = scmp.lt.s32.totalorder %s234, 7
          %s236 = scalar_select %p235, %s234, 7
          %s237 = smul.addr %s236, 8
          %s238 = scalar_lea.vmem %s0, %s237
          %s239 = smul.u32 2, %s16
        $region44: #{tpu_custom_call.1} parent=39 // pred_fallthru
          _
      $region40: #{tpu_custom_call.1} parent=5 // pred_fallthru
        _
      %p240 = scmp.le.s32.totalorder 1, %s16
      %p241 = scmp.lt.s32.totalorder %s16, 5
      %p242 = pnand %p240, %p241
      %p243 = pneg %p242
      // Predicated region
      $region45: #{tpu_custom_call.1} parent=5 // pred_check
        _
      $region46: #{tpu_custom_call.1} parent=5 // pred_check_branch
        %245 = sbr.rel (%p242) target = $region48
      $region47: #{tpu_custom_call.1} parent=5 // pred_region
        %s246 = ssub.s32 %s16, 1
        %s247 = smul.u32 2, %s21
        %p248 = scmp.lt.s32.totalorder %s247, 7
        %s249 = scalar_select %p248, %s247, 7
        %s250 = smul.addr %s249, 8
        %s251 = scalar_lea.vmem %s0, %s250
        %p252 = pneg %p42
        %p253 = pneg %p39
        %p254 = pneg %p63
        %p255 = pneg %p60
        %p256 = pneg %p84
        %p257 = pneg %p81
        %p258 = pneg %p105
        %p259 = pneg %p102
        %p260 = pneg %p126
        %p261 = pneg %p123
        %p262 = pneg %p147
        %p263 = pneg %p144
        %p264 = pneg %p168
        %p265 = pneg %p165
        %p266 = pneg %p194
        %p267 = pneg %p191
        %s268 = sand.u32 %s181, 1
        %s269 = scalar_lea.sflag [#allocation3], %s268
        %s270 = sand.u32 %s181, 1
        %s271 = smul.addr %s270, 16
        %s272 = scalar_lea.vmem [#allocation2], %s271
        %s273 = smul.u32 2, %s21
        %p274 = scmp.lt.s32.totalorder %s273, 7
        %s275 = scalar_select %p274, %s273, 7
        %s276 = smul.addr %s275, 8
        %s277 = scalar_lea.vmem %s0, %s276
        %s278 = smul.u32 2, %s21
        %s279 = smul.u32 2, %s21
        %v280 = vld [vmem:[%s277] sm:$0xff]
        %v281 = vld [vmem:[%s277 + $0x8] sm:$0xff]
        %v282 = vld [vmem:[%s1] sm:$0xff]
        %v283 = vld [vmem:[%s1 + $0x8] sm:$0xff]
        %v284 = vld [vmem:[%s1 + $0x10] sm:$0xff]
        %v285 = vld [vmem:[%s1 + $0x18] sm:$0xff]
        %v286 = vld [vmem:[%s1 + $0x20] sm:$0xff]
        %v287 = vld [vmem:[%s1 + $0x28] sm:$0xff]
        %v288 = vld [vmem:[%s1 + $0x30] sm:$0xff]
        %v289 = vld [vmem:[%s1 + $0x38] sm:$0xff]
        %v290 = vld [vmem:[%s1 + $0x40] sm:$0xff]
        %v291 = vld [vmem:[%s1 + $0x48] sm:$0xff]
        %v292 = vld [vmem:[%s1 + $0x50] sm:$0xff]
        %v293 = vld [vmem:[%s1 + $0x58] sm:$0xff]
        %v294 = vld [vmem:[%s1 + $0x60] sm:$0xff]
        %v295 = vld [vmem:[%s1 + $0x68] sm:$0xff]
        %v296 = vld [vmem:[%s1 + $0x70] sm:$0xff]
        %v297 = vld [vmem:[%s1 + $0x78] sm:$0xff]
        %v298 = vld [vmem:[%s2] sm:$0x1]
        %v300 = vlaneseq
        %v301 = vshrl.u32 %v300, 7
        %v302 = vsub.s32 0, %v301
        %v303 = vrot.slane %v298, %v302
        %305 = vmatprep.subr.mxu0 0.0
        %306 = vmatpush1.msra.mxu0 %v282
        %307 = vmatprep.subr.mxu0 0.0
        %308 = vmatpush1.msra.mxu0 %v283
        %309 = vmatprep.subr.mxu0 0.0
        %310 = vmatpush1.msra.mxu0 %v284
        %311 = vmatprep.subr.mxu0 0.0
        %312 = vmatpush1.msra.mxu0 %v285
        %313 = vmatprep.subr.mxu0 0.0
        %314 = vmatpush1.msra.mxu0 %v286
        %315 = vmatprep.subr.mxu0 0.0
        %316 = vmatpush1.msra.mxu0 %v287
        %317 = vmatprep.subr.mxu0 0.0
        %318 = vmatpush1.msra.mxu0 %v288
        %319 = vmatprep.subr.mxu0 0.0
        %320 = vmatpush1.msra.mxu0 %v289
        %321 = vmatprep.subr.mxu0 0.0
        %322 = vmatpush1.msra.mxu0 %v290
        %323 = vmatprep.subr.mxu0 0.0
        %324 = vmatpush1.msra.mxu0 %v291
        %325 = vmatprep.subr.mxu0 0.0
        %326 = vmatpush1.msra.mxu0 %v292
        %327 = vmatprep.subr.mxu0 0.0
        %328 = vmatpush1.msra.mxu0 %v293
        %329 = vmatprep.subr.mxu0 0.0
        %330 = vmatpush1.msra.mxu0 %v294
        %331 = vmatprep.subr.mxu0 0.0
        %332 = vmatpush1.msra.mxu0 %v295
        %333 = vmatprep.subr.mxu0 0.0
        %334 = vmatpush1.msra.mxu0 %v296
        %335 = vmatprep.subr.mxu0 0.0
        %336 = vmatpush1.msra.mxu0 %v297
        %337 = vmatprep.subr.mxu0 0.0
        %338 = vmatpush1.msra.mxu0 0.0
        %339 = vmatprep.subr.mxu0 0.0
        %340 = vmatpush1.msra.mxu0 0.0
        %341 = vmatprep.subr.mxu0 0.0
        %342 = vmatpush1.msra.mxu0 0.0
        %343 = vmatprep.subr.mxu0 0.0
        %344 = vmatpush1.msra.mxu0 0.0
        %345 = vmatprep.subr.mxu0 0.0
        %346 = vmatpush1.msra.mxu0 0.0
        %347 = vmatprep.subr.mxu0 0.0
        %348 = vmatpush1.msra.mxu0 0.0
        %349 = vmatprep.subr.mxu0 0.0
        %350 = vmatpush1.msra.mxu0 0.0
        %351 = vmatprep.subr.mxu0 0.0
        %352 = vmatpush1.msra.mxu0 0.0
        %353 = vmatprep.subr.mxu0 0.0
        %354 = vmatpush1.msra.mxu0 0.0
        %355 = vmatprep.subr.mxu0 0.0
        %356 = vmatpush1.msra.mxu0 0.0
        %357 = vmatprep.subr.mxu0 0.0
        %358 = vmatpush1.msra.mxu0 0.0
        %359 = vmatprep.subr.mxu0 0.0
        %360 = vmatpush1.msra.mxu0 0.0
        %361 = vmatprep.subr.mxu0 0.0
        %362 = vmatpush1.msra.mxu0 0.0
        %363 = vmatprep.subr.mxu0 0.0
        %364 = vmatpush1.msra.mxu0 0.0
        %365 = vmatprep.subr.mxu0 0.0
        %366 = vmatpush1.msra.mxu0 0.0
        %367 = vmatprep.subr.mxu0 0.0
        %368 = vmatpush1.msra.mxu0 0.0
        %369 = vmatprep.mubr.f32.mxu0 0.0
        %370 = vmatmul.mubr.f32.gmra.mrb[0].mxu0 %v280
        %v371 = vpop.f32.mrb[0].mxu0
        %v372 = vadd.f32 %v303, %v371
        %v373 = vpop.f32.mrb[0].mxu0
        %374 = vmatprep.mubr.f32.mxu0 0.0
        %375 = vmatmul.mubr.f32.gmra.mrb[0].mxu0 %v281
        %v376 = vpop.f32.mrb[0].mxu0
        %v377 = vadd.f32 %v303, %v376
        %v378 = vpop.f32.mrb[0].mxu0
        %379 = vdwg.mxu0
        %v380 = vtanh.pop %v372
        %v381 = vtanh.pop %v377
        %v382 = vld [vmem:[%s3] sm:$0xff]
        %v383 = vld [vmem:[%s3 + $0x8] sm:$0xff]
        %v384 = vld [vmem:[%s3 + $0x10] sm:$0xff]
        %v385 = vld [vmem:[%s3 + $0x18] sm:$0xff]
        %v386 = vld [vmem:[%s3 + $0x20] sm:$0xff]
        %v387 = vld [vmem:[%s3 + $0x28] sm:$0xff]
        %v388 = vld [vmem:[%s3 + $0x30] sm:$0xff]
        %v389 = vld [vmem:[%s3 + $0x38] sm:$0xff]
        %v390 = vld [vmem:[%s4] sm:$0x1]
        %v392 = vlaneseq
        %v393 = vshrl.u32 %v392, 7
        %v394 = vsub.s32 0, %v393
        %v395 = vrot.slane %v390, %v394
        %vm397 = vcmask 523264
        %v399 = vsel %vm397, %v380, 0
        %v402 = vsel %vm397, %v381, 0
        %404 = vmatprep.subr.mxu0 0.0
        %405 = vmatpush1.msra.mxu0 %v382
        %406 = vmatprep.subr.mxu0 0.0
        %407 = vmatpush1.msra.mxu0 %v383
        %408 = vmatprep.subr.mxu0 0.0
        %409 = vmatpush1.msra.mxu0 %v384
        %410 = vmatprep.subr.mxu0 0.0
        %411 = vmatpush1.msra.mxu0 %v385
        %412 = vmatprep.subr.mxu0 0.0
        %413 = vmatpush1.msra.mxu0 %v386
        %414 = vmatprep.subr.mxu0 0.0
        %415 = vmatpush1.msra.mxu0 %v387
        %416 = vmatprep.subr.mxu0 0.0
        %417 = vmatpush1.msra.mxu0 %v388
        %418 = vmatprep.subr.mxu0 0.0
        %419 = vmatpush1.msra.mxu0 %v389
        %420 = vmatprep.subr.mxu0 0.0
        %421 = vmatpush1.msra.mxu0 0.0
        %422 = vmatprep.subr.mxu0 0.0
        %423 = vmatpush1.msra.mxu0 0.0
        %424 = vmatprep.subr.mxu0 0.0
        %425 = vmatpush1.msra.mxu0 0.0
        %426 = vmatprep.subr.mxu0 0.0
        %427 = vmatpush1.msra.mxu0 0.0
        %428 = vmatprep.subr.mxu0 0.0
        %429 = vmatpush1.msra.mxu0 0.0
        %430 = vmatprep.subr.mxu0 0.0
        %431 = vmatpush1.msra.mxu0 0.0
        %432 = vmatprep.subr.mxu0 0.0
        %433 = vmatpush1.msra.mxu0 0.0
        %434 = vmatprep.subr.mxu0 0.0
        %435 = vmatpush1.msra.mxu0 0.0
        %436 = vmatprep.subr.mxu0 0.0
        %437 = vmatpush1.msra.mxu0 0.0
        %438 = vmatprep.subr.mxu0 0.0
        %439 = vmatpush1.msra.mxu0 0.0
        %440 = vmatprep.subr.mxu0 0.0
        %441 = vmatpush1.msra.mxu0 0.0
        %442 = vmatprep.subr.mxu0 0.0
        %443 = vmatpush1.msra.mxu0 0.0
        %444 = vmatprep.subr.mxu0 0.0
        %445 = vmatpush1.msra.mxu0 0.0
        %446 = vmatprep.subr.mxu0 0.0
        %447 = vmatpush1.msra.mxu0 0.0
        %448 = vmatprep.subr.mxu0 0.0
        %449 = vmatpush1.msra.mxu0 0.0
        %450 = vmatprep.subr.mxu0 0.0
        %451 = vmatpush1.msra.mxu0 0.0
        %452 = vmatprep.subr.mxu0 0.0
        %453 = vmatpush1.msra.mxu0 0.0
        %454 = vmatprep.subr.mxu0 0.0
        %455 = vmatpush1.msra.mxu0 0.0
        %456 = vmatprep.subr.mxu0 0.0
        %457 = vmatpush1.msra.mxu0 0.0
        %458 = vmatprep.subr.mxu0 0.0
        %459 = vmatpush1.msra.mxu0 0.0
        %460 = vmatprep.subr.mxu0 0.0
        %461 = vmatpush1.msra.mxu0 0.0
        %462 = vmatprep.subr.mxu0 0.0
        %463 = vmatpush1.msra.mxu0 0.0
        %464 = vmatprep.subr.mxu0 0.0
        %465 = vmatpush1.msra.mxu0 0.0
        %466 = vmatprep.subr.mxu0 0.0
        %467 = vmatpush1.msra.mxu0 0.0
        %468 = vmatprep.mubr.f32.mxu0 0.0
        %469 = vmatmul.mubr.f32.gmra.mrb[0].mxu0 %v399
        %v470 = vpop.f32.mrb[0].mxu0
        %v471 = vadd.f32 %v395, %v470
        %v472 = vpop.f32.mrb[0].mxu0
        %473 = vmatprep.mubr.f32.mxu0 0.0
        %474 = vmatmul.mubr.f32.gmra.mrb[0].mxu0 %v402
        %v475 = vpop.f32.mrb[0].mxu0
        %v476 = vadd.f32 %v395, %v475
        %v477 = vpop.f32.mrb[0].mxu0
        %478 = vdwg.mxu0
        %v479 = vtanh.pop %v471
        %v480 = vtanh.pop %v476
        %v481 = vld [vmem:[%s5] sm:$0xff]
        %v482 = vld [vmem:[%s5 + $0x8] sm:$0xff]
        %v483 = vld [vmem:[%s5 + $0x10] sm:$0xff]
        %v484 = vld [vmem:[%s5 + $0x18] sm:$0xff]
        %v485 = vld [vmem:[%s6] sm:$0x1]
        %v487 = vlaneseq
        %v488 = vshrl.u32 %v487, 7
        %v489 = vsub.s32 0, %v488
        %v490 = vrot.slane %v485, %v489
        %vm492 = vcmask 261120
        %v494 = vsel %vm492, %v479, 0
        %v497 = vsel %vm492, %v480, 0
        %499 = vmatprep.subr.mxu0 0.0
        %500 = vmatpush1.msra.mxu0 %v481
        %501 = vmatprep.subr.mxu0 0.0
        %502 = vmatpush1.msra.mxu0 %v482
        %503 = vmatprep.subr.mxu0 0.0
        %504 = vmatpush1.msra.mxu0 %v483
        %505 = vmatprep.subr.mxu0 0.0
        %506 = vmatpush1.msra.mxu0 %v484
        %507 = vmatprep.subr.mxu0 0.0
        %508 = vmatpush1.msra.mxu0 0.0
        %509 = vmatprep.subr.mxu0 0.0
        %510 = vmatpush1.msra.mxu0 0.0
        %511 = vmatprep.subr.mxu0 0.0
        %512 = vmatpush1.msra.mxu0 0.0
        %513 = vmatprep.subr.mxu0 0.0
        %514 = vmatpush1.msra.mxu0 0.0
        %515 = vmatprep.subr.mxu0 0.0
        %516 = vmatpush1.msra.mxu0 0.0
        %517 = vmatprep.subr.mxu0 0.0
        %518 = vmatpush1.msra.mxu0 0.0
        %519 = vmatprep.subr.mxu0 0.0
        %520 = vmatpush1.msra.mxu0 0.0
        %521 = vmatprep.subr.mxu0 0.0
        %522 = vmatpush1.msra.mxu0 0.0
        %523 = vmatprep.subr.mxu0 0.0
        %524 = vmatpush1.msra.mxu0 0.0
        %525 = vmatprep.subr.mxu0 0.0
        %526 = vmatpush1.msra.mxu0 0.0
        %527 = vmatprep.subr.mxu0 0.0
        %528 = vmatpush1.msra.mxu0 0.0
        %529 = vmatprep.subr.mxu0 0.0
        %530 = vmatpush1.msra.mxu0 0.0
        %531 = vmatprep.subr.mxu0 0.0
        %532 = vmatpush1.msra.mxu0 0.0
        %533 = vmatprep.subr.mxu0 0.0
        %534 = vmatpush1.msra.mxu0 0.0
        %535 = vmatprep.subr.mxu0 0.0
        %536 = vmatpush1.msra.mxu0 0.0
        %537 = vmatprep.subr.mxu0 0.0
        %538 = vmatpush1.msra.mxu0 0.0
        %539 = vmatprep.subr.mxu0 0.0
        %540 = vmatpush1.msra.mxu0 0.0
        %541 = vmatprep.subr.mxu0 0.0
        %542 = vmatpush1.msra.mxu0 0.0
        %543 = vmatprep.subr.mxu0 0.0
        %544 = vmatpush1.msra.mxu0 0.0
        %545 = vmatprep.subr.mxu0 0.0
        %546 = vmatpush1.msra.mxu0 0.0
        %547 = vmatprep.subr.mxu0 0.0
        %548 = vmatpush1.msra.mxu0 0.0
        %549 = vmatprep.subr.mxu0 0.0
        %550 = vmatpush1.msra.mxu0 0.0
        %551 = vmatprep.subr.mxu0 0.0
        %552 = vmatpush1.msra.mxu0 0.0
        %553 = vmatprep.subr.mxu0 0.0
        %554 = vmatpush1.msra.mxu0 0.0
        %555 = vmatprep.subr.mxu0 0.0
        %556 = vmatpush1.msra.mxu0 0.0
        %557 = vmatprep.subr.mxu0 0.0
        %558 = vmatpush1.msra.mxu0 0.0
        %559 = vmatprep.subr.mxu0 0.0
        %560 = vmatpush1.msra.mxu0 0.0
        %561 = vmatprep.subr.mxu0 0.0
        %562 = vmatpush1.msra.mxu0 0.0
        %563 = vmatprep.mubr.f32.mxu0 0.0
        %564 = vmatmul.mubr.f32.gmra.mrb[0].mxu0 %v494
        %v565 = vpop.f32.mrb[0].mxu0
        %v566 = vadd.f32 %v490, %v565
        %v567 = vpop.f32.mrb[0].mxu0
        %568 = vmatprep.mubr.f32.mxu0 0.0
        %569 = vmatmul.mubr.f32.gmra.mrb[0].mxu0 %v497
        %v570 = vpop.f32.mrb[0].mxu0
        %v571 = vadd.f32 %v490, %v570
        %v572 = vpop.f32.mrb[0].mxu0
        %573 = vdwg.mxu0
        %v574 = vtanh.pop %v566
        %v575 = vtanh.pop %v571
        %576 = vst [vmem:[%s272] sm:$0xff] %v574
        %577 = vst [vmem:[%s272 + $0x8] sm:$0xff] %v575
        %s578 = sand.u32 %s181, 1
        %s579 = scalar_lea.sflag [#allocation3], %s578
        %s580 = sand.u32 %s181, 1
        %s581 = smul.addr %s580, 16
        %s582 = scalar_lea.vmem [#allocation2], %s581
        // Predicated region
        $region49: #{tpu_custom_call.1} parent=47 // pred_check
          %p583 = pneg %p191
        $region50: #{tpu_custom_call.1} parent=47 // pred_check_branch
          %585 = sbr.rel (%p583) target = $region52
        $region51: #{tpu_custom_call.1} parent=47 // pred_region
          %s586 = smul.u32 2, %s21
          %s588 = ssub.s32 256, 256
          %589 = vsyncadd %s579, %s588
          %s590 = smul.addr %s586, 128
          %s591 = scalar_lea.hbm %s7, %s590
          %s592 = sshll.u32 %s582, 4
          %s593 = int_to_ptr.vmem [resolvable:$true] %s592
          %598 = dma.vmem_to_hbm [thread:$0]  %s593, 256, %s591, %s579, 128, 128, 8
        $region52: #{tpu_custom_call.1} parent=47 // pred_fallthru
          _
      $region48: #{tpu_custom_call.1} parent=5 // pred_fallthru
        _
      %p599 = scmp.le.s32.totalorder 2, %s16
      // Predicated region
      $region53: #{tpu_custom_call.1} parent=5 // pred_check
        %p600 = pneg %p599
      $region54: #{tpu_custom_call.1} parent=5 // pred_check_branch
        %602 = sbr.rel (%p600) target = $region56
      $region55: #{tpu_custom_call.1} parent=5 // pred_region
        %s603 = ssub.s32 %s16, 2
        // Predicated region
        $region57: #{tpu_custom_call.1} parent=55 // pred_check
          %p604 = pneg %p197
        $region58: #{tpu_custom_call.1} parent=55 // pred_check_branch
          %606 = sbr.rel (%p604) target = $region60
        $region59: #{tpu_custom_call.1} parent=55 // pred_region
          %s607 = sand.u32 %s182, 1
          %s608 = scalar_lea.sflag [#allocation3], %s607
          %s609 = sand.u32 %s182, 1
          %s610 = smul.addr %s609, 16
          %s611 = scalar_lea.vmem [#allocation2], %s610
          %612 = dma.done %s608, 256
        $region60: #{tpu_custom_call.1} parent=55 // pred_fallthru
          _
      $region56: #{tpu_custom_call.1} parent=5 // pred_fallthru
        _
    $region6: #{tpu_custom_call.1} parent=1 // loop_footer
      %s20 = sadd.s32 1, %s16
    $region7: #{tpu_custom_call.1} parent=1 // loop_footer_branch
      %15 = sbr.rel target = $region3
    $region8: #{tpu_custom_call.1} parent=1 // loop_exit
      _
    %613 = vsyncpa [#allocation3], 1
    %s614 = scalar_lea.sflag [#allocation3], 1
    %615 = vsyncpa %s614, 1

</llo_original>
